<compile_context>
chip_gen: v7x
topology: tpu7x:2x2x1
jax: 0.10.0
libtpu: 0.0.40
codegen_flags: <defaults>
</compile_context>

<pallas_src>
import functools

import jax
import jax.numpy as jnp
from jax.experimental import pallas as pl
from jax.experimental.pallas import tpu as pltpu

# ---------------------------------------------------------------------------
# Deterministic "config" (stand-in for src/utils/config.yaml).
# ---------------------------------------------------------------------------
NUM_PARAMS = 8
PARAM_WEIGHTS = (0.5, 1.0, 1.5, 2.0, 0.25, 0.75, 1.25, 1.75)
ALPHA = 0.01   # L2 regularization coefficient
BETA = 0.001   # L1 regularization coefficient

_LANES = 128      # vreg lane width
_SUBLANES = 8     # f32 sublanes per vreg (accumulator height)
_ROW_ALIGN = 16   # block sublane alignment valid for both f32 and bf16


def _cdiv(a, b):
    return (a + b - 1) // b


def _detect_num_cores():
    """Best-effort TensorCore count (chunk axis is sharded across cores)."""
    try:
        info = pltpu.get_tpu_info()
    except Exception:
        return 1
    for name in ("num_cores", "core_count", "num_tensorcores", "tensor_core_count"):
        n = getattr(info, name, None)
        if n is None:
            continue
        try:
            n = int(n)
        except Exception:
            continue
        if 1 <= n <= 16:
            return n
    return 1


def _acc(acc_ref, x):
    """acc_ref: (8,128) f32 accumulator; x: (tile_rows,128) f32 tile values."""
    r = x.shape[0]
    if r % _SUBLANES == 0:
        # Fold tile_rows -> 8 sublane partials with pure vreg adds (no XLU).
        acc_ref[...] += x.reshape(r // _SUBLANES, _SUBLANES, _LANES).sum(axis=0)
    else:
        # Tiny-input fallback (rows < 16 and not a multiple of 8).
        acc_ref[0:1, :] += x.sum(axis=0, keepdims=True)


def _bnai_loss_kernel(pred_ref, tgt_ref, dsq_ref, psq_ref, abs_ref, *,
                      rows, tile_rows, steps, needs_mask):
    """One (tile_rows, 128) streaming step of the fused reduction.

    pred_ref, tgt_ref          : (tile_rows, 128) VMEM input blocks
    dsq_ref, psq_ref, abs_ref  : (8, 128) per-chunk accumulators (outputs)
    """
    c = pl.program_id(0)
    i = pl.program_id(1)

    @pl.when(i == 0)
    def _init():
        dsq_ref[...] = jnp.zeros_like(dsq_ref)
        psq_ref[...] = jnp.zeros_like(psq_ref)
        abs_ref[...] = jnp.zeros_like(abs_ref)

    p = pred_ref[...].astype(jnp.float32)    # f32 accumulation even for bf16 in
    t = tgt_ref[...].astype(jnp.float32)

    def accumulate(pv, tv):
        d = pv - tv
        _acc(dsq_ref, d * d)          # un-weighted: weights applied in epilogue
        _acc(psq_ref, pv * pv)
        _acc(abs_ref, jnp.abs(pv))

    if not needs_mask:
        accumulate(p, t)
    else:
        r0 = (c * steps + i) * tile_rows

        @pl.when(r0 + tile_rows <= rows)
        def _full_tile():                     # interior tile: no masking cost
            accumulate(p, t)

        @pl.when(r0 + tile_rows > rows)
        def _ragged_tile():                   # boundary / clamped tile: mask rows
            ridx = r0 + jax.lax.broadcasted_iota(jnp.int32, (tile_rows, 1), 0)
            valid = ridx < rows
            accumulate(jnp.where(valid, p, 0.0), jnp.where(valid, t, 0.0))


def bnai_loss(predictions, targets, param_weights=PARAM_WEIGHTS,
              alpha=ALPHA, beta=BETA, tile_rows=None, n_chunks=None):
    """predictions, targets: (B, P) float arrays (f32 or bf16). Scalar f32 loss."""
    B, P = predictions.shape
    assert targets.shape == (B, P)
    assert predictions.dtype == targets.dtype
    assert _LANES % P == 0, "num_params must divide 128 for lane-dense layout"
    w_list = tuple(float(w) for w in param_weights)
    assert len(w_list) == P

    itemsize = jnp.dtype(predictions.dtype).itemsize
    total = B * P

    # Lane-dense view.  When total % 128 == 0 this is a pure (free) reshape.
    p_flat = predictions.reshape(-1)
    t_flat = targets.reshape(-1)
    rem = total % _LANES
    if rem:
        # TODO(synk): a non-multiple-of-128 element count forces one flat copy
        # (<=127 zeros appended); the kernel path is copy-free when B*P % 128 == 0.
        pad = _LANES - rem
        p_flat = jnp.pad(p_flat, (0, pad))
        t_flat = jnp.pad(t_flat, (0, pad))
    rows = p_flat.shape[0] // _LANES
    p2 = p_flat.reshape(rows, _LANES)
    t2 = t_flat.reshape(rows, _LANES)

    # ---- tiling -----------------------------------------------------------
    if tile_rows is None:
        # 4 MiB per input block: 8192 rows f32 / 16384 rows bf16 (v6e/v7x
        # roofline-friendly; v5e handled via the explicit vmem limit below).
        tile_rows = (4 * 1024 * 1024) // (_LANES * itemsize)
    tile_rows = int(tile_rows)
    if tile_rows >= rows:
        tile_rows = rows                              # single full block
    else:
        tile_rows = max(_ROW_ALIGN, (tile_rows // _ROW_ALIGN) * _ROW_ALIGN)
    total_tiles = _cdiv(rows, tile_rows)

    if n_chunks is None:
        n_chunks = _detect_num_cores()                # 1 on v5e/v6e
    n_chunks = max(1, min(int(n_chunks), total_tiles))
    steps = _cdiv(total_tiles, n_chunks)
    needs_mask = (n_chunks * steps * tile_rows) != rows

    kernel = functools.partial(_bnai_loss_kernel, rows=rows, tile_rows=tile_rows,
                               steps=steps, needs_mask=needs_mask)

    def in_map(c, i):
        # Clamp so a chunk with fewer real tiles never issues a fully
        # out-of-bounds DMA; its extra iterations are masked to zero in-kernel.
        return (jnp.minimum(c * steps + i, total_tiles - 1), 0)

    in_spec = pl.BlockSpec((tile_rows, _LANES), in_map)
    acc_shape = jax.ShapeDtypeStruct((n_chunks, _SUBLANES, _LANES), jnp.float32)
    acc_spec = pl.BlockSpec((None, _SUBLANES, _LANES), lambda c, i: (c, 0, 0))

    in_block_bytes = 2 * 2 * tile_rows * _LANES * itemsize   # 2 inputs x 2 buffers
    vmem_limit = int(max(32 << 20, in_block_bytes + (8 << 20)))

    dsq, psq, pab = pl.pallas_call(
        kernel,
        out_shape=(acc_shape, acc_shape, acc_shape),
        grid_spec=pltpu.PrefetchScalarGridSpec(
            num_scalar_prefetch=0,
            grid=(n_chunks, steps),
            in_specs=[in_spec, in_spec],
            out_specs=[acc_spec, acc_spec, acc_spec],
        ),
        compiler_params=pltpu.CompilerParams(
            # TODO(synk): on v7x, switch the chunk axis to pltpu.CORE_PARALLEL
            # (with n_chunks == TC count) once verified active in a trace.
            dimension_semantics=("parallel", "arbitrary"),
            vmem_limit_bytes=vmem_limit),
    )(p2, t2)

    # Epilogue (tiny): periodic per-lane weight pattern applied once, sqrt only
    # after the full sum of squares is assembled.  Zero padding is inert.
    w_lane = jnp.tile(jnp.asarray(w_list, jnp.float32), _LANES // P)   # (128,)
    dsq_lane = jnp.sum(dsq, axis=(0, 1))                               # (128,)
    loss = (jnp.sum(w_lane * dsq_lane)
            + jnp.float32(alpha) * jnp.sqrt(jnp.sum(psq))
            + jnp.float32(beta) * jnp.sum(pab))
    return loss


def _bnai_loss_ref(predictions, targets, param_weights=PARAM_WEIGHTS,
                   alpha=ALPHA, beta=BETA):
    """Pure-JAX reference mirroring the PyTorch forward exactly."""
    p = predictions.astype(jnp.float32)
    t = targets.astype(jnp.float32)
    w = jnp.asarray(param_weights, jnp.float32)
    loss = jnp.sum(w[None, :] * (p - t) ** 2)
    loss += alpha * jnp.sqrt(jnp.sum(p * p))
    loss += beta * jnp.sum(jnp.abs(p))
    return loss


if __name__ == "__main__":
    key = jax.random.PRNGKey(0)
    ks = jax.random.split(key, 8)

    # 1) f32, forced small tiles + 2 chunks: exercises multi-step accumulation,
    #    a ragged (masked) boundary tile and a clamped fully-masked tile.
    B1 = 1040   # 1040*8 = 8320 elems -> 65 lane-rows, 5 tiles of 16, 2 chunks
    p1 = jax.random.normal(ks[0], (B1, NUM_PARAMS), dtype=jnp.float32)
    t1 = jax.random.normal(ks[1], (B1, NUM_PARAMS), dtype=jnp.float32)
    l1 = bnai_loss(p1, t1, tile_rows=16, n_chunks=2)
    jax.block_until_ready(l1)
    r1 = _bnai_loss_ref(p1, t1)
    assert jnp.allclose(l1, r1, rtol=1e-4, atol=1e-2), (l1, r1)

    # 2) f32, default tiling, rows (17) not a multiple of 8: single full block.
    B2 = 272
    p2 = jax.random.normal(ks[2], (B2, NUM_PARAMS), dtype=jnp.float32)
    t2 = jax.random.normal(ks[3], (B2, NUM_PARAMS), dtype=jnp.float32)
    l2 = bnai_loss(p2, t2)
    jax.block_until_ready(l2)
    r2 = _bnai_loss_ref(p2, t2)
    assert jnp.allclose(l2, r2, rtol=1e-4, atol=1e-2), (l2, r2)

    # 3) f32, B*P not a multiple of 128: minimal-pad fallback path.
    B3 = 123
    p3 = jax.random.normal(ks[4], (B3, NUM_PARAMS), dtype=jnp.float32)
    t3 = jax.random.normal(ks[5], (B3, NUM_PARAMS), dtype=jnp.float32)
    l3 = bnai_loss(p3, t3)
    jax.block_until_ready(l3)
    r3 = _bnai_loss_ref(p3, t3)
    assert jnp.allclose(l3, r3, rtol=1e-4, atol=1e-2), (l3, r3)

    # 4) bf16 inputs (halves HBM bytes); kernel still accumulates in f32.
    B4 = 256
    p4 = jax.random.normal(ks[6], (B4, NUM_PARAMS), dtype=jnp.bfloat16)
    t4 = jax.random.normal(ks[7], (B4, NUM_PARAMS), dtype=jnp.bfloat16)
    l4 = bnai_loss(p4, t4)
    jax.block_until_ready(l4)
    r4 = _bnai_loss_ref(p4, t4)
    assert jnp.allclose(l4, r4, rtol=2e-3, atol=1e-1), (l4, r4)

    print("KERNEL_OK")
</pallas_src>

<mosaic_0001>
module attributes {stable_mosaic.version = 11 : i64} {
  func.func @_bnai_loss_kernel(%arg0: i32, %arg1: i32, %arg2: memref<16x128xf32, #tpu.memory_space<vmem>>, %arg3: memref<16x128xf32, #tpu.memory_space<vmem>>, %arg4: memref<1x8x128xf32, #tpu.memory_space<vmem>>, %arg5: memref<1x8x128xf32, #tpu.memory_space<vmem>>, %arg6: memref<1x8x128xf32, #tpu.memory_space<vmem>>) attributes {dimension_semantics = [#tpu.dimension_semantics<parallel>, #tpu.dimension_semantics<arbitrary>], iteration_bounds = array<i64: 2, 3>, scalar_prefetch = 0 : i64, scratch_operands = 0 : i64, tpu.core_type = #tpu.core_type<tc>, window_params = [{transform_indices = @transform_0, window_bounds = array<i64: 16, 128>}, {transform_indices = @transform_1, window_bounds = array<i64: 16, 128>}, {transform_indices = @transform_2, window_bounds = array<i64: 1, 8, 128>}, {transform_indices = @transform_3, window_bounds = array<i64: 1, 8, 128>}, {transform_indices = @transform_4, window_bounds = array<i64: 1, 8, 128>}]} {
    %c0_i32 = arith.constant 0 : i32
    %0 = arith.cmpi eq, %arg1, %c0_i32 : i32
    %1 = arith.extui %0 : i1 to i32
    %c0_i32_0 = arith.constant 0 : i32
    %2 = arith.cmpi ne, %1, %c0_i32_0 : i32
    scf.if %2 {
      %cst = arith.constant 0.000000e+00 : f32
      %16 = vector.broadcast %cst : f32 to vector<8x128xf32>
      %c0_9 = arith.constant 0 : index
      %c0_10 = arith.constant 0 : index
      %c0_11 = arith.constant 0 : index
      %17 = vector.load %arg4[%c0_9, %c0_10, %c0_11] : memref<1x8x128xf32, #tpu.memory_space<vmem>>, vector<1x8x128xf32>
      %18 = vector.shape_cast %17 : vector<1x8x128xf32> to vector<8x128xf32>
      %19 = vector.shape_cast %16 : vector<8x128xf32> to vector<1x8x128xf32>
      tpu.vector_store %arg4[%c0_9, %c0_10, %c0_11], %19 {strides = array<i32>} : memref<1x8x128xf32, #tpu.memory_space<vmem>>, vector<1x8x128xf32>,
      %cst_12 = arith.constant 0.000000e+00 : f32
      %20 = vector.broadcast %cst_12 : f32 to vector<8x128xf32>
      %c0_13 = arith.constant 0 : index
      %c0_14 = arith.constant 0 : index
      %c0_15 = arith.constant 0 : index
      %21 = vector.load %arg5[%c0_13, %c0_14, %c0_15] : memref<1x8x128xf32, #tpu.memory_space<vmem>>, vector<1x8x128xf32>
      %22 = vector.shape_cast %21 : vector<1x8x128xf32> to vector<8x128xf32>
      %23 = vector.shape_cast %20 : vector<8x128xf32> to vector<1x8x128xf32>
      tpu.vector_store %arg5[%c0_13, %c0_14, %c0_15], %23 {strides = array<i32>} : memref<1x8x128xf32, #tpu.memory_space<vmem>>, vector<1x8x128xf32>,
      %cst_16 = arith.constant 0.000000e+00 : f32
      %24 = vector.broadcast %cst_16 : f32 to vector<8x128xf32>
      %c0_17 = arith.constant 0 : index
      %c0_18 = arith.constant 0 : index
      %c0_19 = arith.constant 0 : index
      %25 = vector.load %arg6[%c0_17, %c0_18, %c0_19] : memref<1x8x128xf32, #tpu.memory_space<vmem>>, vector<1x8x128xf32>
      %26 = vector.shape_cast %25 : vector<1x8x128xf32> to vector<8x128xf32>
      %27 = vector.shape_cast %24 : vector<8x128xf32> to vector<1x8x128xf32>
      tpu.vector_store %arg6[%c0_17, %c0_18, %c0_19], %27 {strides = array<i32>} : memref<1x8x128xf32, #tpu.memory_space<vmem>>, vector<1x8x128xf32>,
    } else {
    }
    %c0 = arith.constant 0 : index
    %c0_1 = arith.constant 0 : index
    %3 = vector.load %arg2[%c0, %c0_1] : memref<16x128xf32, #tpu.memory_space<vmem>>, vector<16x128xf32>
    %c0_2 = arith.constant 0 : index
    %c0_3 = arith.constant 0 : index
    %4 = vector.load %arg3[%c0_2, %c0_3] : memref<16x128xf32, #tpu.memory_space<vmem>>, vector<16x128xf32>
    %c3_i32 = arith.constant 3 : i32
    %5 = arith.muli %arg0, %c3_i32 : i32
    %6 = arith.addi %5, %arg1 : i32
    %c16_i32 = arith.constant 16 : i32
    %7 = arith.muli %6, %c16_i32 : i32
    %c16_i32_4 = arith.constant 16 : i32
    %8 = arith.addi %7, %c16_i32_4 : i32
    %c65_i32 = arith.constant 65 : i32
    %9 = arith.cmpi sle, %8, %c65_i32 : i32
    %10 = arith.extui %9 : i1 to i32
    %c0_i32_5 = arith.constant 0 : i32
    %11 = arith.cmpi ne, %10, %c0_i32_5 : i32
    scf.if %11 {
      %16 = arith.subf %3, %4 : vector<16x128xf32>
      %17 = arith.mulf %16, %16 : vector<16x128xf32>
      %c0_9 = arith.constant 0 : index
      %c0_10 = arith.constant 0 : index
      %c0_11 = arith.constant 0 : index
      %18 = vector.load %arg4[%c0_9, %c0_10, %c0_11] : memref<1x8x128xf32, #tpu.memory_space<vmem>>, vector<1x8x128xf32>
      %19 = vector.shape_cast %18 : vector<1x8x128xf32> to vector<8x128xf32>
      %20 = vector.shape_cast %17 : vector<16x128xf32> to vector<2x8x128xf32>
      %cst = arith.constant dense<0.000000e+00> : vector<8x128xf32>
      %21 = vector.multi_reduction <add>, %20, %cst [0] : vector<2x8x128xf32> to vector<8x128xf32>
      %22 = arith.addf %19, %21 : vector<8x128xf32>
      %c0_12 = arith.constant 0 : index
      %c0_13 = arith.constant 0 : index
      %c0_14 = arith.constant 0 : index
      %23 = vector.load %arg4[%c0_12, %c0_13, %c0_14] : memref<1x8x128xf32, #tpu.memory_space<vmem>>, vector<1x8x128xf32>
      %24 = vector.shape_cast %23 : vector<1x8x128xf32> to vector<8x128xf32>
      %25 = vector.shape_cast %22 : vector<8x128xf32> to vector<1x8x128xf32>
      tpu.vector_store %arg4[%c0_12, %c0_13, %c0_14], %25 {strides = array<i32>} : memref<1x8x128xf32, #tpu.memory_space<vmem>>, vector<1x8x128xf32>,
      %26 = arith.mulf %3, %3 : vector<16x128xf32>
      %c0_15 = arith.constant 0 : index
      %c0_16 = arith.constant 0 : index
      %c0_17 = arith.constant 0 : index
      %27 = vector.load %arg5[%c0_15, %c0_16, %c0_17] : memref<1x8x128xf32, #tpu.memory_space<vmem>>, vector<1x8x128xf32>
      %28 = vector.shape_cast %27 : vector<1x8x128xf32> to vector<8x128xf32>
      %29 = vector.shape_cast %26 : vector<16x128xf32> to vector<2x8x128xf32>
      %cst_18 = arith.constant dense<0.000000e+00> : vector<8x128xf32>
      %30 = vector.multi_reduction <add>, %29, %cst_18 [0] : vector<2x8x128xf32> to vector<8x128xf32>
      %31 = arith.addf %28, %30 : vector<8x128xf32>
      %c0_19 = arith.constant 0 : index
      %c0_20 = arith.constant 0 : index
      %c0_21 = arith.constant 0 : index
      %32 = vector.load %arg5[%c0_19, %c0_20, %c0_21] : memref<1x8x128xf32, #tpu.memory_space<vmem>>, vector<1x8x128xf32>
      %33 = vector.shape_cast %32 : vector<1x8x128xf32> to vector<8x128xf32>
      %34 = vector.shape_cast %31 : vector<8x128xf32> to vector<1x8x128xf32>
      tpu.vector_store %arg5[%c0_19, %c0_20, %c0_21], %34 {strides = array<i32>} : memref<1x8x128xf32, #tpu.memory_space<vmem>>, vector<1x8x128xf32>,
      %35 = math.absf %3 : vector<16x128xf32>
      %c0_22 = arith.constant 0 : index
      %c0_23 = arith.constant 0 : index
      %c0_24 = arith.constant 0 : index
      %36 = vector.load %arg6[%c0_22, %c0_23, %c0_24] : memref<1x8x128xf32, #tpu.memory_space<vmem>>, vector<1x8x128xf32>
      %37 = vector.shape_cast %36 : vector<1x8x128xf32> to vector<8x128xf32>
      %38 = vector.shape_cast %35 : vector<16x128xf32> to vector<2x8x128xf32>
      %cst_25 = arith.constant dense<0.000000e+00> : vector<8x128xf32>
      %39 = vector.multi_reduction <add>, %38, %cst_25 [0] : vector<2x8x128xf32> to vector<8x128xf32>
      %40 = arith.addf %37, %39 : vector<8x128xf32>
      %c0_26 = arith.constant 0 : index
      %c0_27 = arith.constant 0 : index
      %c0_28 = arith.constant 0 : index
      %41 = vector.load %arg6[%c0_26, %c0_27, %c0_28] : memref<1x8x128xf32, #tpu.memory_space<vmem>>, vector<1x8x128xf32>
      %42 = vector.shape_cast %41 : vector<1x8x128xf32> to vector<8x128xf32>
      %43 = vector.shape_cast %40 : vector<8x128xf32> to vector<1x8x128xf32>
      tpu.vector_store %arg6[%c0_26, %c0_27, %c0_28], %43 {strides = array<i32>} : memref<1x8x128xf32, #tpu.memory_space<vmem>>, vector<1x8x128xf32>,
    } else {
    }
    %c16_i32_6 = arith.constant 16 : i32
    %12 = arith.addi %7, %c16_i32_6 : i32
    %c65_i32_7 = arith.constant 65 : i32
    %13 = arith.cmpi sgt, %12, %c65_i32_7 : i32
    %14 = arith.extui %13 : i1 to i32
    %c0_i32_8 = arith.constant 0 : i32
    %15 = arith.cmpi ne, %14, %c0_i32_8 : i32
    scf.if %15 {
      %16 = tpu.iota {dimensions = array<i32: 0>} : vector<16x1xi32>
      %17 = vector.broadcast %7 : i32 to vector<16x1xi32>
      %18 = arith.addi %17, %16 : vector<16x1xi32>
      %c65_i32_9 = arith.constant 65 : i32
      %19 = vector.broadcast %c65_i32_9 : i32 to vector<16x1xi32>
      %20 = arith.cmpi slt, %18, %19 : vector<16x1xi32>
      %cst = arith.constant 0.000000e+00 : f32
      %21 = vector.shape_cast %20 : vector<16x1xi1> to vector<16x1xi1>
      %22 = vector.broadcast %21 : vector<16x1xi1> to vector<16x128xi1>
      %23 = vector.broadcast %cst : f32 to vector<16x128xf32>
      %24 = arith.select %22, %3, %23 : vector<16x128xi1>, vector<16x128xf32>
      %cst_10 = arith.constant 0.000000e+00 : f32
      %25 = vector.shape_cast %20 : vector<16x1xi1> to vector<16x1xi1>
      %26 = vector.broadcast %25 : vector<16x1xi1> to vector<16x128xi1>
      %27 = vector.broadcast %cst_10 : f32 to vector<16x128xf32>
      %28 = arith.select %26, %4, %27 : vector<16x128xi1>, vector<16x128xf32>
      %29 = arith.subf %24, %28 : vector<16x128xf32>
      %30 = arith.mulf %29, %29 : vector<16x128xf32>
      %c0_11 = arith.constant 0 : index
      %c0_12 = arith.constant 0 : index
      %c0_13 = arith.constant 0 : index
      %31 = vector.load %arg4[%c0_11, %c0_12, %c0_13] : memref<1x8x128xf32, #tpu.memory_space<vmem>>, vector<1x8x128xf32>
      %32 = vector.shape_cast %31 : vector<1x8x128xf32> to vector<8x128xf32>
      %33 = vector.shape_cast %30 : vector<16x128xf32> to vector<2x8x128xf32>
      %cst_14 = arith.constant dense<0.000000e+00> : vector<8x128xf32>
      %34 = vector.multi_reduction <add>, %33, %cst_14 [0] : vector<2x8x128xf32> to vector<8x128xf32>
      %35 = arith.addf %32, %34 : vector<8x128xf32>
      %c0_15 = arith.constant 0 : index
      %c0_16 = arith.constant 0 : index
      %c0_17 = arith.constant 0 : index
      %36 = vector.load %arg4[%c0_15, %c0_16, %c0_17] : memref<1x8x128xf32, #tpu.memory_space<vmem>>, vector<1x8x128xf32>
      %37 = vector.shape_cast %36 : vector<1x8x128xf32> to vector<8x128xf32>
      %38 = vector.shape_cast %35 : vector<8x128xf32> to vector<1x8x128xf32>
      tpu.vector_store %arg4[%c0_15, %c0_16, %c0_17], %38 {strides = array<i32>} : memref<1x8x128xf32, #tpu.memory_space<vmem>>, vector<1x8x128xf32>,
      %39 = arith.mulf %24, %24 : vector<16x128xf32>
      %c0_18 = arith.constant 0 : index
      %c0_19 = arith.constant 0 : index
      %c0_20 = arith.constant 0 : index
      %40 = vector.load %arg5[%c0_18, %c0_19, %c0_20] : memref<1x8x128xf32, #tpu.memory_space<vmem>>, vector<1x8x128xf32>
      %41 = vector.shape_cast %40 : vector<1x8x128xf32> to vector<8x128xf32>
      %42 = vector.shape_cast %39 : vector<16x128xf32> to vector<2x8x128xf32>
      %cst_21 = arith.constant dense<0.000000e+00> : vector<8x128xf32>
      %43 = vector.multi_reduction <add>, %42, %cst_21 [0] : vector<2x8x128xf32> to vector<8x128xf32>
      %44 = arith.addf %41, %43 : vector<8x128xf32>
      %c0_22 = arith.constant 0 : index
      %c0_23 = arith.constant 0 : index
      %c0_24 = arith.constant 0 : index
      %45 = vector.load %arg5[%c0_22, %c0_23, %c0_24] : memref<1x8x128xf32, #tpu.memory_space<vmem>>, vector<1x8x128xf32>
      %46 = vector.shape_cast %45 : vector<1x8x128xf32> to vector<8x128xf32>
      %47 = vector.shape_cast %44 : vector<8x128xf32> to vector<1x8x128xf32>
      tpu.vector_store %arg5[%c0_22, %c0_23, %c0_24], %47 {strides = array<i32>} : memref<1x8x128xf32, #tpu.memory_space<vmem>>, vector<1x8x128xf32>,
      %48 = math.absf %24 : vector<16x128xf32>
      %c0_25 = arith.constant 0 : index
      %c0_26 = arith.constant 0 : index
      %c0_27 = arith.constant 0 : index
      %49 = vector.load %arg6[%c0_25, %c0_26, %c0_27] : memref<1x8x128xf32, #tpu.memory_space<vmem>>, vector<1x8x128xf32>
      %50 = vector.shape_cast %49 : vector<1x8x128xf32> to vector<8x128xf32>
      %51 = vector.shape_cast %48 : vector<16x128xf32> to vector<2x8x128xf32>
      %cst_28 = arith.constant dense<0.000000e+00> : vector<8x128xf32>
      %52 = vector.multi_reduction <add>, %51, %cst_28 [0] : vector<2x8x128xf32> to vector<8x128xf32>
      %53 = arith.addf %50, %52 : vector<8x128xf32>
      %c0_29 = arith.constant 0 : index
      %c0_30 = arith.constant 0 : index
      %c0_31 = arith.constant 0 : index
      %54 = vector.load %arg6[%c0_29, %c0_30, %c0_31] : memref<1x8x128xf32, #tpu.memory_space<vmem>>, vector<1x8x128xf32>
      %55 = vector.shape_cast %54 : vector<1x8x128xf32> to vector<8x128xf32>
      %56 = vector.shape_cast %53 : vector<8x128xf32> to vector<1x8x128xf32>
      tpu.vector_store %arg6[%c0_29, %c0_30, %c0_31], %56 {strides = array<i32>} : memref<1x8x128xf32, #tpu.memory_space<vmem>>, vector<1x8x128xf32>,
    } else {
    }
    return
  }
  func.func @transform_0(%arg0: i32, %arg1: i32) -> (i32, i32) {
    %c3_i32 = arith.constant 3 : i32
    %0 = arith.muli %arg0, %c3_i32 : i32
    %1 = arith.addi %0, %arg1 : i32
    %c4_i32 = arith.constant 4 : i32
    %2 = arith.minsi %1, %c4_i32 : i32
    %c0_i32 = arith.constant 0 : i32
    %c0_i32_0 = arith.constant 0 : i32
    return %2, %c0_i32 : i32, i32
  }
  func.func @transform_1(%arg0: i32, %arg1: i32) -> (i32, i32) {
    %c3_i32 = arith.constant 3 : i32
    %0 = arith.muli %arg0, %c3_i32 : i32
    %1 = arith.addi %0, %arg1 : i32
    %c4_i32 = arith.constant 4 : i32
    %2 = arith.minsi %1, %c4_i32 : i32
    %c0_i32 = arith.constant 0 : i32
    %c0_i32_0 = arith.constant 0 : i32
    return %2, %c0_i32 : i32, i32
  }
  func.func @transform_2(%arg0: i32, %arg1: i32) -> (i32, i32, i32) {
    %c0_i32 = arith.constant 0 : i32
    %c0_i32_0 = arith.constant 0 : i32
    %c0_i32_1 = arith.constant 0 : i32
    return %arg0, %c0_i32, %c0_i32_0 : i32, i32, i32
  }
  func.func @transform_3(%arg0: i32, %arg1: i32) -> (i32, i32, i32) {
    %c0_i32 = arith.constant 0 : i32
    %c0_i32_0 = arith.constant 0 : i32
    %c0_i32_1 = arith.constant 0 : i32
    return %arg0, %c0_i32, %c0_i32_0 : i32, i32, i32
  }
  func.func @transform_4(%arg0: i32, %arg1: i32) -> (i32, i32, i32) {
    %c0_i32 = arith.constant 0 : i32
    %c0_i32_0 = arith.constant 0 : i32
    %c0_i32_1 = arith.constant 0 : i32
    return %arg0, %c0_i32, %c0_i32_0 : i32, i32, i32
  }
}

</mosaic_0001>

<llo_original>
// kernel: tpu_custom_call.1
$region0: #{tpu_custom_call.1}
  #allocation0 [shape = 'u32[]', space=smem, size = 0x4, offset = 0x4, fixed_abs, tag = 'smem constant byte address 0x4 - core index']
  #allocation1 [shape = 'u32[144,128]{1,0:T(1,128)}', space=vmem, size = 0x12000, scoped, tag = 'internal scratch']
  %s0 = inlined_call_operand.hbm [shape: f32[65,128], index: 0, kind: input, shape index: {}]
  %s1 = inlined_call_operand.hbm [shape: f32[65,128], index: 1, kind: input, shape index: {}]
  %s2 = inlined_call_operand.hbm [shape: f32[2,8,128], index: 2, kind: output, shape index: {0}]
  %s3 = inlined_call_operand.hbm [shape: f32[2,8,128], index: 3, kind: output, shape index: {1}]
  %s4 = inlined_call_operand.hbm [shape: f32[2,8,128], index: 4, kind: output, shape index: {2}]
  %5 = xla_tuple %s2, %s3, %s4
  %s6 = sld [smem:[#allocation0]]
  $region77: #{tpu_custom_call.1} parent=0
    _
  %s8 = ssub.s32 1, %s6
  %s9 = scalar_select 0, %s8, %s6
  $region1: #{tpu_custom_call.1} parent=0
    #allocation2 [shape = 'u8[16384]{0}', space=vmem, size = 0x4000, scoped, tag = 'input window, operand 0']
    #allocation3 [shape = 's32[2]{0}', space=sflag, size = 0x8, scoped, tag = 'scoped memory for tpu_custom_call.1']
    #allocation4 [shape = 's32[2]{0}', space=sflag, size = 0x8, scoped, tag = 'scoped memory for tpu_custom_call.1']
    #allocation5 [shape = 'u8[16384]{0}', space=vmem, size = 0x4000, scoped, tag = 'input window, operand 1']
    #allocation6 [shape = 's32[2]{0}', space=sflag, size = 0x8, scoped, tag = 'scoped memory for tpu_custom_call.1']
    #allocation7 [shape = 'u8[8192]{0}', space=vmem, size = 0x2000, scoped, tag = 'output window, operand 0']
    #allocation8 [shape = 'u8[8192]{0}', space=vmem, size = 0x2000, scoped, tag = 'output window, operand 1']
    #allocation9 [shape = 's32[2]{0}', space=sflag, size = 0x8, scoped, tag = 'scoped memory for tpu_custom_call.1']
    #allocation10 [shape = 'u8[8192]{0}', space=vmem, size = 0x2000, scoped, tag = 'output window, operand 2']
    %10 = vsyncpa [#allocation3], 0
    %s11 = scalar_lea.sflag [#allocation3], 1
    %12 = vsyncpa %s11, 0
    %13 = vsyncpa [#allocation6], 0
    %s14 = scalar_lea.sflag [#allocation6], 1
    %15 = vsyncpa %s14, 0
    %16 = vsyncpa [#allocation4], 0
    %s17 = scalar_lea.sflag [#allocation4], 1
    %18 = vsyncpa %s17, 0
    %19 = vsyncpa [#allocation9], 0
    %s20 = scalar_lea.sflag [#allocation9], 1
    %21 = vsyncpa %s20, 0
    loop: start=0, step=1, limit=8
    $region2: #{tpu_custom_call.1} parent=1 // loop_pre_header
      _
    $region3: #{tpu_custom_call.1} parent=1 // loop_header
      %s23 = sphi 0, %s27
      %p24 = scmp.ge.s32.totalorder %s23, 8
      %s30 = sphi 0, %s42
      %s31 = sphi 0, %s38
      %s32 = sphi 0, %s30
      %s33 = sphi 0, %s31
      %s34 = sphi 0, %s32
      %s35 = sphi 0, %s33
      %s53 = sphi 0, %s55
      %s56 = sphi 0, %s53
      %s57 = sphi 0, %s56
      %s73 = sphi 0, %s57
      %s87 = sphi 0, %s89
      %s90 = sphi 0, %s87
      %s91 = sphi 0, %s90
      %s107 = sphi 0, %s91
      %s113 = sphi 0, %s115
      %s116 = sphi 0, %s113
      %s117 = sphi 0, %s116
      %s133 = sphi 0, %s117
      %s139 = sphi 0, %s141
      %s142 = sphi 0, %s139
      %s143 = sphi 0, %s142
      %s159 = sphi 0, %s143
      %s165 = sphi 0, %s167
      %s168 = sphi 0, %s165
      %s169 = sphi 0, %s168
      %s185 = sphi 0, %s169
    $region4: #{tpu_custom_call.1} parent=1 // loop_header_branch
      %26 = sbr.rel (%p24) target = $region8
    $region5: #{tpu_custom_call.1} parent=1 // loop_body
      %s28 = ssub.s32 %s23, 1
      %s29 = ssub.s32 %s23, 2
      %s36 = sadd.s32 1, %s31
      %p37 = scmp.ge.s32.totalorder %s36, 3
      %s38 = scalar_select %p37, 0, %s36
      %s39 = sadd.s32 1, %s30
      %s40 = scalar_select %p37, %s39, %s30
      %p41 = scmp.ge.s32.totalorder %s40, 2
      %s42 = scalar_select %p41, 0, %s40
      %s43 = smul.u32 %s30, 3
      %s44 = sadd.s32 %s43, %s31
      %p45 = scmp.lt.s32.totalorder %s44, 4
      %s46 = scalar_select %p45, %s44, 4
      %s47 = smul.u32 %s42, 3
      %s48 = sadd.s32 %s47, %s38
      %p49 = scmp.lt.s32.totalorder %s48, 4
      %s50 = scalar_select %p49, %s48, 4
      %s51 = ssub.s32 %s46, %s50
      %p52 = scmp.eq.s32.totalorder %s51, 0
      %s54 = sadd.s32 %s53, 1
      %s55 = scalar_select %p52, %s53, %s54
      %p58 = pneg %p52
      %p59 = scmp.eq.s32.totalorder %s23, 5
      %p60 = por %p58, %p59
      %p61 = scmp.ne.s32.totalorder %s53, %s56
      %p62 = scmp.eq.s32.totalorder %s23, 0
      %p63 = por %p61, %p62
      %p64 = scmp.ne.s32.totalorder %s53, %s56
      %p65 = scmp.eq.s32.totalorder %s28, 5
      %p66 = por %p64, %p65
      %p67 = scmp.ne.s32.totalorder %s56, %s57
      %p68 = scmp.eq.s32.totalorder %s28, 0
      %p69 = por %p67, %p68
      %p70 = scmp.ne.s32.totalorder %s56, %s57
      %p71 = scmp.eq.s32.totalorder %s29, 5
      %p72 = por %p70, %p71
      %p74 = scmp.ne.s32.totalorder %s57, %s73
      %p75 = scmp.eq.s32.totalorder %s29, 0
      %p76 = por %p74, %p75
      %s77 = smul.u32 %s30, 3
      %s78 = sadd.s32 %s77, %s31
      %p79 = scmp.lt.s32.totalorder %s78, 4
      %s80 = scalar_select %p79, %s78, 4
      %s81 = smul.u32 %s42, 3
      %s82 = sadd.s32 %s81, %s38
      %p83 = scmp.lt.s32.totalorder %s82, 4
      %s84 = scalar_select %p83, %s82, 4
      %s85 = ssub.s32 %s80, %s84
      %p86 = scmp.eq.s32.totalorder %s85, 0
      %s88 = sadd.s32 %s87, 1
      %s89 = scalar_select %p86, %s87, %s88
      %p92 = pneg %p86
      %p93 = scmp.eq.s32.totalorder %s23, 5
      %p94 = por %p92, %p93
      %p95 = scmp.ne.s32.totalorder %s87, %s90
      %p96 = scmp.eq.s32.totalorder %s23, 0
      %p97 = por %p95, %p96
      %p98 = scmp.ne.s32.totalorder %s87, %s90
      %p99 = scmp.eq.s32.totalorder %s28, 5
      %p100 = por %p98, %p99
      %p101 = scmp.ne.s32.totalorder %s90, %s91
      %p102 = scmp.eq.s32.totalorder %s28, 0
      %p103 = por %p101, %p102
      %p104 = scmp.ne.s32.totalorder %s90, %s91
      %p105 = scmp.eq.s32.totalorder %s29, 5
      %p106 = por %p104, %p105
      %p108 = scmp.ne.s32.totalorder %s91, %s107
      %p109 = scmp.eq.s32.totalorder %s29, 0
      %p110 = por %p108, %p109
      %s111 = ssub.s32 %s30, %s42
      %p112 = scmp.eq.s32.totalorder %s111, 0
      %s114 = sadd.s32 %s113, 1
      %s115 = scalar_select %p112, %s113, %s114
      %p118 = pneg %p112
      %p119 = scmp.eq.s32.totalorder %s23, 5
      %p120 = por %p118, %p119
      %p121 = scmp.ne.s32.totalorder %s113, %s116
      %p122 = scmp.eq.s32.totalorder %s23, 0
      %p123 = por %p121, %p122
      %p124 = scmp.ne.s32.totalorder %s113, %s116
      %p125 = scmp.eq.s32.totalorder %s28, 5
      %p126 = por %p124, %p125
      %p127 = scmp.ne.s32.totalorder %s116, %s117
      %p128 = scmp.eq.s32.totalorder %s28, 0
      %p129 = por %p127, %p128
      %p130 = scmp.ne.s32.totalorder %s116, %s117
      %p131 = scmp.eq.s32.totalorder %s29, 5
      %p132 = por %p130, %p131
      %p134 = scmp.ne.s32.totalorder %s117, %s133
      %p135 = scmp.eq.s32.totalorder %s29, 0
      %p136 = por %p134, %p135
      %s137 = ssub.s32 %s30, %s42
      %p138 = scmp.eq.s32.totalorder %s137, 0
      %s140 = sadd.s32 %s139, 1
      %s141 = scalar_select %p138, %s139, %s140
      %p144 = pneg %p138
      %p145 = scmp.eq.s32.totalorder %s23, 5
      %p146 = por %p144, %p145
      %p147 = scmp.ne.s32.totalorder %s139, %s142
      %p148 = scmp.eq.s32.totalorder %s23, 0
      %p149 = por %p147, %p148
      %p150 = scmp.ne.s32.totalorder %s139, %s142
      %p151 = scmp.eq.s32.totalorder %s28, 5
      %p152 = por %p150, %p151
      %p153 = scmp.ne.s32.totalorder %s142, %s143
      %p154 = scmp.eq.s32.totalorder %s28, 0
      %p155 = por %p153, %p154
      %p156 = scmp.ne.s32.totalorder %s142, %s143
      %p157 = scmp.eq.s32.totalorder %s29, 5
      %p158 = por %p156, %p157
      %p160 = scmp.ne.s32.totalorder %s143, %s159
      %p161 = scmp.eq.s32.totalorder %s29, 0
      %p162 = por %p160, %p161
      %s163 = ssub.s32 %s30, %s42
      %p164 = scmp.eq.s32.totalorder %s163, 0
      %s166 = sadd.s32 %s165, 1
      %s167 = scalar_select %p164, %s165, %s166
      %p170 = pneg %p164
      %p171 = scmp.eq.s32.totalorder %s23, 5
      %p172 = por %p170, %p171
      %p173 = scmp.ne.s32.totalorder %s165, %s168
      %p174 = scmp.eq.s32.totalorder %s23, 0
      %p175 = por %p173, %p174
      %p176 = scmp.ne.s32.totalorder %s165, %s168
      %p177 = scmp.eq.s32.totalorder %s28, 5
      %p178 = por %p176, %p177
      %p179 = scmp.ne.s32.totalorder %s168, %s169
      %p180 = scmp.eq.s32.totalorder %s28, 0
      %p181 = por %p179, %p180
      %p182 = scmp.ne.s32.totalorder %s168, %s169
      %p183 = scmp.eq.s32.totalorder %s29, 5
      %p184 = por %p182, %p183
      %p186 = scmp.ne.s32.totalorder %s169, %s185
      %p187 = scmp.eq.s32.totalorder %s29, 0
      %p188 = por %p186, %p187
      %p189 = scmp.le.s32.totalorder 1, %s23
      %p190 = scmp.lt.s32.totalorder %s23, 7
      %p191 = pnand %p189, %p190
      %p192 = pneg %p191
      // Predicated region
      $region9: #{tpu_custom_call.1} parent=5 // pred_check
        _
      $region10: #{tpu_custom_call.1} parent=5 // pred_check_branch
        %194 = sbr.rel (%p191) target = $region12
      $region11: #{tpu_custom_call.1} parent=5 // pred_region
        %s195 = ssub.s32 %s23, 1
      $region12: #{tpu_custom_call.1} parent=5 // pred_fallthru
        _
      %p196 = scmp.lt.s32.totalorder %s23, 6
      // Predicated region
      $region13: #{tpu_custom_call.1} parent=5 // pred_check
        %p197 = pneg %p196
      $region14: #{tpu_custom_call.1} parent=5 // pred_check_branch
        %199 = sbr.rel (%p197) target = $region16
      $region15: #{tpu_custom_call.1} parent=5 // pred_region
        // Predicated region
        $region17: #{tpu_custom_call.1} parent=15 // pred_check
          %p200 = pneg %p63
        $region18: #{tpu_custom_call.1} parent=15 // pred_check_branch
          %202 = sbr.rel (%p200) target = $region20
        $region19: #{tpu_custom_call.1} parent=15 // pred_region
          %s203 = sand.u32 %s53, 1
          %s204 = scalar_lea.sflag [#allocation3], %s203
          %s205 = sand.u32 %s53, 1
          %s206 = smul.addr %s205, 16
          %s207 = scalar_lea.vmem [#allocation2], %s206
          %s208 = smul.u32 %s30, 3
          %s209 = sadd.s32 %s208, %s31
          %p210 = scmp.lt.s32.totalorder %s209, 4
          %s211 = scalar_select %p210, %s209, 4
          %s212 = smul.u32 2, %s211
          %s213 = ssub.s32 9, %s212
          %p214 = scmp.lt.s32.totalorder %s213, 2
          %s215 = scalar_select %p214, %s213, 2
          %s216 = smul.u32 128, %s215
          %s218 = ssub.s32 256, %s216
          %219 = vsyncadd %s204, %s218
          %p220 = scmp.ne.s32.totalorder 0, %s216
          %s221 = smul.addr %s212, 128
          %s222 = scalar_lea.hbm %s0, %s221
          %s223 = smul.u32 8, %s215
          %s224 = sshll.u32 %s207, 4
          %s225 = int_to_ptr.vmem [resolvable:$true] %s224
          %s226 = sshll.u32 %s223, 4
          %230 = dma.hbm_to_vmem [thread:$0]  (%p220), %s222, %s226, %s225, %s204, 128, 128, 8
        $region20: #{tpu_custom_call.1} parent=15 // pred_fallthru
          _
        // Predicated region
        $region21: #{tpu_custom_call.1} parent=15 // pred_check
          %p231 = pneg %p97
        $region22: #{tpu_custom_call.1} parent=15 // pred_check_branch
          %233 = sbr.rel (%p231) target = $region24
        $region23: #{tpu_custom_call.1} parent=15 // pred_region
          %s234 = sand.u32 %s87, 1
          %s235 = scalar_lea.sflag [#allocation6], %s234
          %s236 = sand.u32 %s87, 1
          %s237 = smul.addr %s236, 16
          %s238 = scalar_lea.vmem [#allocation5], %s237
          %s239 = smul.u32 %s30, 3
          %s240 = sadd.s32 %s239, %s31
          %p241 = scmp.lt.s32.totalorder %s240, 4
          %s242 = scalar_select %p241, %s240, 4
          %s243 = smul.u32 2, %s242
          %s244 = ssub.s32 9, %s243
          %p245 = scmp.lt.s32.totalorder %s244, 2
          %s246 = scalar_select %p245, %s244, 2
          %s247 = smul.u32 128, %s246
          %s249 = ssub.s32 256, %s247
          %250 = vsyncadd %s235, %s249
          %p251 = scmp.ne.s32.totalorder 0, %s247
          %s252 = smul.addr %s243, 128
          %s253 = scalar_lea.hbm %s1, %s252
          %s254 = smul.u32 8, %s246
          %s255 = sshll.u32 %s238, 4
          %s256 = int_to_ptr.vmem [resolvable:$true] %s255
          %s257 = sshll.u32 %s254, 4
          %261 = dma.hbm_to_vmem [thread:$0]  (%p251), %s253, %s257, %s256, %s235, 128, 128, 8
        $region24: #{tpu_custom_call.1} parent=15 // pred_fallthru
          _
      $region16: #{tpu_custom_call.1} parent=5 // pred_fallthru
        _
      %p262 = scmp.le.s32.totalorder 1, %s23
      %p263 = scmp.lt.s32.totalorder %s23, 7
      %p264 = pnand %p262, %p263
      %p265 = pneg %p264
      // Predicated region
      $region25: #{tpu_custom_call.1} parent=5 // pred_check
        _
      $region26: #{tpu_custom_call.1} parent=5 // pred_check_branch
        %267 = sbr.rel (%p264) target = $region28
      $region27: #{tpu_custom_call.1} parent=5 // pred_region
        %s268 = ssub.s32 %s23, 1
        %s269 = sand.u32 %s56, 1
        %s270 = scalar_lea.sflag [#allocation3], %s269
        %s271 = sand.u32 %s56, 1
        %s272 = smul.addr %s271, 16
        %s273 = scalar_lea.vmem [#allocation2], %s272
        // Predicated region
        $region29: #{tpu_custom_call.1} parent=27 // pred_check
          %p274 = pneg %p69
        $region30: #{tpu_custom_call.1} parent=27 // pred_check_branch
          %276 = sbr.rel (%p274) target = $region32
        $region31: #{tpu_custom_call.1} parent=27 // pred_region
          %277 = dma.done %s270, 256
        $region32: #{tpu_custom_call.1} parent=27 // pred_fallthru
          _
        %s278 = sand.u32 %s90, 1
        %s279 = scalar_lea.sflag [#allocation6], %s278
        %s280 = sand.u32 %s90, 1
        %s281 = smul.addr %s280, 16
        %s282 = scalar_lea.vmem [#allocation5], %s281
        // Predicated region
        $region33: #{tpu_custom_call.1} parent=27 // pred_check
          %p283 = pneg %p103
        $region34: #{tpu_custom_call.1} parent=27 // pred_check_branch
          %285 = sbr.rel (%p283) target = $region36
        $region35: #{tpu_custom_call.1} parent=27 // pred_region
          %286 = dma.done %s279, 256
        $region36: #{tpu_custom_call.1} parent=27 // pred_fallthru
          _
        %s287 = sand.u32 %s56, 1
        %s288 = scalar_lea.sflag [#allocation3], %s287
        %s289 = sand.u32 %s56, 1
        %s290 = smul.addr %s289, 16
        %s291 = scalar_lea.vmem [#allocation2], %s290
        %p292 = pneg %p69
        %p293 = pneg %p66
        %s294 = sand.u32 %s90, 1
        %s295 = scalar_lea.sflag [#allocation6], %s294
        %s296 = sand.u32 %s90, 1
        %s297 = smul.addr %s296, 16
        %s298 = scalar_lea.vmem [#allocation5], %s297
        %p299 = pneg %p103
        %p300 = pneg %p100
        %p301 = pneg %p129
        %p302 = pneg %p126
        %s303 = sand.u32 %s116, 1
        %s304 = scalar_lea.sflag [#allocation4], %s303
        %s305 = sand.u32 %s116, 1
        %s306 = smul.addr %s305, 8
        %s307 = scalar_lea.vmem [#allocation7], %s306
        %p308 = pneg %p155
        %p309 = pneg %p152
        %s310 = sand.u32 %s28, 1
        %s311 = scalar_lea.sflag [#allocation9], %s310
        %s312 = sand.u32 %s142, 1
        %s313 = smul.addr %s312, 8
        %s314 = scalar_lea.vmem [#allocation8], %s313
        %p315 = pneg %p181
        %p316 = pneg %p178
        %s317 = sand.u32 %s28, 1
        %s318 = scalar_lea.sflag [#allocation9], %s317
        %s319 = sand.u32 %s168, 1
        %s320 = smul.addr %s319, 8
        %s321 = scalar_lea.vmem [#allocation10], %s320
        %s322 = smul.u32 %s32, 3
        %s323 = sadd.s32 %s322, %s33
        %p324 = scmp.lt.s32.totalorder %s323, 4
        %s325 = scalar_select %p324, %s323, 4
        %s326 = smul.u32 2, %s325
        %s327 = ssub.s32 9, %s326
        %p328 = scmp.lt.s32.totalorder %s327, 2
        %s329 = scalar_select %p328, %s327, 2
        %s330 = smul.u32 128, %s329
        %s331 = smul.u32 %s32, 3
        %s332 = sadd.s32 %s331, %s33
        %p333 = scmp.lt.s32.totalorder %s332, 4
        %s334 = scalar_select %p333, %s332, 4
        %s335 = smul.u32 2, %s334
        %s336 = ssub.s32 9, %s335
        %p337 = scmp.lt.s32.totalorder %s336, 2
        %s338 = scalar_select %p337, %s336, 2
        %s339 = smul.u32 128, %s338
        %p340 = scmp.eq.s32.totalorder %s33, 0
        // Predicated region
        $region37: #{tpu_custom_call.1} parent=27 // pred_check
          %p341 = pneg %p340
        $region38: #{tpu_custom_call.1} parent=27 // pred_check_branch
          %343 = sbr.rel (%p341) target = $region40
        $region39: #{tpu_custom_call.1} parent=27 // pred_region
          %344 = vst [vmem:[%s307] sm:$0xff] 0.0
          %345 = vst [vmem:[%s314] sm:$0xff] 0.0
          %346 = vst [vmem:[%s321] sm:$0xff] 0.0
        $region40: #{tpu_custom_call.1} parent=27 // pred_fallthru
          _
        %v347 = vld [vmem:[%s273] sm:$0xff]
        %v348 = vld [vmem:[%s273 + $0x8] sm:$0xff]
        %v349 = vld [vmem:[%s282] sm:$0xff]
        %v350 = vld [vmem:[%s282 + $0x8] sm:$0xff]
        %s351 = smul.u32 %s32, 3
        %s352 = sadd.s32 %s351, %s33
        %s353 = smul.u32 %s352, 16
        %s354 = sadd.s32 %s353, 16
        %p355 = scmp.le.s32.totalorder %s354, 65
        // Predicated region
        $region41: #{tpu_custom_call.1} parent=27 // pred_check
          %p356 = pneg %p355
        $region42: #{tpu_custom_call.1} parent=27 // pred_check_branch
          %358 = sbr.rel (%p356) target = $region44
        $region43: #{tpu_custom_call.1} parent=27 // pred_region
          %v359 = vsub.f32 %v347, %v349
          %v360 = vsub.f32 %v348, %v350
          %v361 = vmul.f32 %v359, %v359
          %v362 = vmul.f32 %v360, %v360
          %v363 = vld [vmem:[%s307] sm:$0xff]
          %v364 = vadd.f32 %v361, %v362
          %v365 = vadd.f32 %v363, %v364
          %366 = vst [vmem:[%s307] sm:$0xff] %v365
          %v367 = vmul.f32 %v347, %v347
          %v368 = vmul.f32 %v348, %v348
          %v369 = vld [vmem:[%s314] sm:$0xff]
          %v370 = vadd.f32 %v367, %v368
          %v371 = vadd.f32 %v369, %v370
          %372 = vst [vmem:[%s314] sm:$0xff] %v371
          %v373 = vand.u32 2147483647, %v347
          %v374 = vand.u32 2147483647, %v348
          %v375 = vld [vmem:[%s321] sm:$0xff]
          %v376 = vadd.f32 %v373, %v374
          %v377 = vadd.f32 %v375, %v376
          %378 = vst [vmem:[%s321] sm:$0xff] %v377
        $region44: #{tpu_custom_call.1} parent=27 // pred_fallthru
          _
        %p379 = scmp.gt.s32.totalorder %s354, 65
        // Predicated region
        $region45: #{tpu_custom_call.1} parent=27 // pred_check
          %p380 = pneg %p379
        $region46: #{tpu_custom_call.1} parent=27 // pred_check_branch
          %382 = sbr.rel (%p380) target = $region48
        $region47: #{tpu_custom_call.1} parent=27 // pred_region
          %v383 = vlaneseq
          %v384 = vshrl.u32 %v383, 7
          %v385 = vadd.s32 %v384, 8
          %v386 = vstv %s353
          %v387 = vadd.s32 %v386, %v384
          %v388 = vadd.s32 %v386, %v385
          %vm389 = vcmp.lt.s32.totalorder %v387, 65
          %vm390 = vcmp.lt.s32.totalorder %v388, 65
          %v391 = vsel %vm389, 1, 0
          %v392 = vsel %vm390, 1, 0
          %vm393 = vcmp.eq.s32.totalorder %v391, 1
          %vm394 = vcmp.eq.s32.totalorder %v392, 1
          %v395 = vsel %vm393, %v347, 0.0
          %v396 = vsel %vm394, %v348, 0.0
          %v397 = vsel %vm393, %v349, 0.0
          %v398 = vsel %vm394, %v350, 0.0
          %v399 = vsub.f32 %v395, %v397
          %v400 = vsub.f32 %v396, %v398
          %v401 = vmul.f32 %v399, %v399
          %v402 = vmul.f32 %v400, %v400
          %v403 = vld [vmem:[%s307] sm:$0xff]
          %v404 = vadd.f32 %v401, %v402
          %v405 = vadd.f32 %v403, %v404
          %406 = vst [vmem:[%s307] sm:$0xff] %v405
          %v407 = vmul.f32 %v395, %v395
          %v408 = vmul.f32 %v396, %v396
          %v409 = vld [vmem:[%s314] sm:$0xff]
          %v410 = vadd.f32 %v407, %v408
          %v411 = vadd.f32 %v409, %v410
          %412 = vst [vmem:[%s314] sm:$0xff] %v411
          %v413 = vand.u32 2147483647, %v395
          %v414 = vand.u32 2147483647, %v396
          %v415 = vld [vmem:[%s321] sm:$0xff]
          %v416 = vadd.f32 %v413, %v414
          %v417 = vadd.f32 %v415, %v416
          %418 = vst [vmem:[%s321] sm:$0xff] %v417
        $region48: #{tpu_custom_call.1} parent=27 // pred_fallthru
          _
        %s419 = sand.u32 %s116, 1
        %s420 = scalar_lea.sflag [#allocation4], %s419
        %s421 = sand.u32 %s116, 1
        %s422 = smul.addr %s421, 8
        %s423 = scalar_lea.vmem [#allocation7], %s422
        %s424 = sand.u32 %s28, 1
        %s425 = scalar_lea.sflag [#allocation9], %s424
        %s426 = sand.u32 %s142, 1
        %s427 = smul.addr %s426, 8
        %s428 = scalar_lea.vmem [#allocation8], %s427
        %s429 = sand.u32 %s28, 1
        %s430 = scalar_lea.sflag [#allocation9], %s429
        %s431 = sand.u32 %s168, 1
        %s432 = smul.addr %s431, 8
        %s433 = scalar_lea.vmem [#allocation10], %s432
        // Predicated region
        $region49: #{tpu_custom_call.1} parent=27 // pred_check
          %p434 = pneg %p126
        $region50: #{tpu_custom_call.1} parent=27 // pred_check_branch
          %436 = sbr.rel (%p434) target = $region52
        $region51: #{tpu_custom_call.1} parent=27 // pred_region
          %s438 = ssub.s32 128, 128
          %439 = vsyncadd %s420, %s438
          %s440 = smul.addr %s32, 128
          %s441 = scalar_lea.hbm %s2, %s440
          %s443 = sshll.u32 %s423, 4
          %s444 = int_to_ptr.vmem [resolvable:$true] %s443
          %446 = dma.vmem_to_hbm [thread:$0]  %s444, 128, %s441, %s420
        $region52: #{tpu_custom_call.1} parent=27 // pred_fallthru
          _
        // Predicated region
        $region53: #{tpu_custom_call.1} parent=27 // pred_check
          %p447 = pneg %p152
        $region54: #{tpu_custom_call.1} parent=27 // pred_check_branch
          %449 = sbr.rel (%p447) target = $region56
        $region55: #{tpu_custom_call.1} parent=27 // pred_region
          %s451 = ssub.s32 128, 128
          %452 = vsyncadd %s425, %s451
          %s453 = smul.addr %s32, 128
          %s454 = scalar_lea.hbm %s3, %s453
          %s456 = sshll.u32 %s428, 4
          %s457 = int_to_ptr.vmem [resolvable:$true] %s456
          %459 = dma.vmem_to_hbm [thread:$0]  %s457, 128, %s454, %s425
        $region56: #{tpu_custom_call.1} parent=27 // pred_fallthru
          _
        // Predicated region
        $region57: #{tpu_custom_call.1} parent=27 // pred_check
          %p460 = pneg %p178
        $region58: #{tpu_custom_call.1} parent=27 // pred_check_branch
          %462 = sbr.rel (%p460) target = $region60
        $region59: #{tpu_custom_call.1} parent=27 // pred_region
          %s464 = ssub.s32 128, 128
          %465 = vsyncadd %s430, %s464
          %s466 = smul.addr %s32, 128
          %s467 = scalar_lea.hbm %s4, %s466
          %s469 = sshll.u32 %s433, 4
          %s470 = int_to_ptr.vmem [resolvable:$true] %s469
          %472 = dma.vmem_to_hbm [thread:$0]  %s470, 128, %s467, %s430
        $region60: #{tpu_custom_call.1} parent=27 // pred_fallthru
          _
      $region28: #{tpu_custom_call.1} parent=5 // pred_fallthru
        _
      %p473 = scmp.le.s32.totalorder 2, %s23
      // Predicated region
      $region61: #{tpu_custom_call.1} parent=5 // pred_check
        %p474 = pneg %p473
      $region62: #{tpu_custom_call.1} parent=5 // pred_check_branch
        %476 = sbr.rel (%p474) target = $region64
      $region63: #{tpu_custom_call.1} parent=5 // pred_region
        %s477 = ssub.s32 %s23, 2
        // Predicated region
        $region65: #{tpu_custom_call.1} parent=63 // pred_check
          %p478 = pneg %p132
        $region66: #{tpu_custom_call.1} parent=63 // pred_check_branch
          %480 = sbr.rel (%p478) target = $region68
        $region67: #{tpu_custom_call.1} parent=63 // pred_region
          %s481 = sand.u32 %s117, 1
          %s482 = scalar_lea.sflag [#allocation4], %s481
          %s483 = sand.u32 %s117, 1
          %s484 = smul.addr %s483, 8
          %s485 = scalar_lea.vmem [#allocation7], %s484
          %486 = dma.done %s482, 128
        $region68: #{tpu_custom_call.1} parent=63 // pred_fallthru
          _
        // Predicated region
        $region69: #{tpu_custom_call.1} parent=63 // pred_check
          %p487 = pneg %p158
        $region70: #{tpu_custom_call.1} parent=63 // pred_check_branch
          %489 = sbr.rel (%p487) target = $region72
        $region71: #{tpu_custom_call.1} parent=63 // pred_region
          %s490 = sand.u32 %s29, 1
          %s491 = scalar_lea.sflag [#allocation9], %s490
          %s492 = sand.u32 %s143, 1
          %s493 = smul.addr %s492, 8
          %s494 = scalar_lea.vmem [#allocation8], %s493
          %495 = dma.done %s491, 128
        $region72: #{tpu_custom_call.1} parent=63 // pred_fallthru
          _
        // Predicated region
        $region73: #{tpu_custom_call.1} parent=63 // pred_check
          %p496 = pneg %p184
        $region74: #{tpu_custom_call.1} parent=63 // pred_check_branch
          %498 = sbr.rel (%p496) target = $region76
        $region75: #{tpu_custom_call.1} parent=63 // pred_region
          %s499 = sand.u32 %s29, 1
          %s500 = scalar_lea.sflag [#allocation9], %s499
          %s501 = sand.u32 %s169, 1
          %s502 = smul.addr %s501, 8
          %s503 = scalar_lea.vmem [#allocation10], %s502
          %504 = dma.done %s500, 128
        $region76: #{tpu_custom_call.1} parent=63 // pred_fallthru
          _
      $region64: #{tpu_custom_call.1} parent=5 // pred_fallthru
        _
    $region6: #{tpu_custom_call.1} parent=1 // loop_footer
      %s27 = sadd.s32 1, %s23
    $region7: #{tpu_custom_call.1} parent=1 // loop_footer_branch
      %22 = sbr.rel target = $region3
    $region8: #{tpu_custom_call.1} parent=1 // loop_exit
      _
    %505 = vsyncpa [#allocation3], 1
    %s506 = scalar_lea.sflag [#allocation3], 1
    %507 = vsyncpa %s506, 1
    %508 = vsyncpa [#allocation6], 1
    %s509 = scalar_lea.sflag [#allocation6], 1
    %510 = vsyncpa %s509, 1
    %511 = vsyncpa [#allocation4], 1
    %s512 = scalar_lea.sflag [#allocation4], 1
    %513 = vsyncpa %s512, 1
    %514 = vsyncpa [#allocation9], 1
    %s515 = scalar_lea.sflag [#allocation9], 1
    %516 = vsyncpa %s515, 1

</llo_original>
